<compile_context>
chip_gen: v6e
topology: v6e:2x2x1
jax: 0.10.0
libtpu: 0.0.40
codegen_flags: <defaults>
</compile_context>

<pallas_src>
import functools

import jax
import jax.numpy as jnp
from jax import lax
from jax.experimental import pallas as pl
from jax.experimental.pallas import tpu as pltpu

_LANES = 512          # lane-dense slab width (multiple of 128)
_SUBLANE = 8
_MAX_TILE_ROWS = 512  # 512x512 f32 block = 1 MiB; 3 arrays x 2 bufs <= 6 MiB VMEM


def _focal_values(x, t, alpha, gamma):
    """Elementwise focal loss on f32 values (torch-equivalent math)."""
    # Numerically-stable BCE-with-logits: max(x,0) - x*t + log1p(exp(-|x|))
    bce = jnp.maximum(x, 0.0) - x * t + jnp.log1p(jnp.exp(-jnp.abs(x)))
    pt = jnp.exp(-bce)
    one_minus_pt = 1.0 - pt
    g = float(gamma)
    if g == round(g) and g >= 0.0:
        # Integer gamma (default 2.0): plain multiplies, no float pow (exp+log).
        focal_term = lax.integer_pow(one_minus_pt, int(round(g)))
    else:
        focal_term = one_minus_pt ** g
    return float(alpha) * focal_term * bce


def _focal_reduce_kernel(x_ref, t_ref, o_ref, *, alpha, gamma, n, needs_mask):
    i = pl.program_id(0)
    x = x_ref[...].astype(jnp.float32)
    t = t_ref[...].astype(jnp.float32)
    focal = _focal_values(x, t, alpha, gamma)
    tr, w = focal.shape  # static block shape

    def write_partial(vals):
        # (tr, w) -> (8, w) per-block partial sums.  The reshape keeps whole
        # (8, 128) native tiles, so the axis-0 reduction is pure VPU adds.
        o_ref[...] = jnp.sum(vals.reshape(tr // _SUBLANE, _SUBLANE, w),
                             axis=0).reshape(1, _SUBLANE, w)

    if needs_mask:
        last = pl.num_programs(0) - 1

        @pl.when(i != last)
        def _():
            write_partial(focal)

        @pl.when(i == last)
        def _():
            # Zero out padded / out-of-bounds tail elements (only the last
            # block can contain them).  jnp.where also guards NaN garbage from
            # ragged out-of-bounds input rows.
            row = lax.broadcasted_iota(jnp.int32, (tr, w), 0)
            col = lax.broadcasted_iota(jnp.int32, (tr, w), 1)
            flat = (i * tr + row) * w + col
            write_partial(jnp.where(flat < n, focal, 0.0))
    else:
        write_partial(focal)


def _focal_elemwise_kernel(x_ref, t_ref, o_ref, *, alpha, gamma):
    x = x_ref[...].astype(jnp.float32)
    t = t_ref[...].astype(jnp.float32)
    o_ref[...] = _focal_values(x, t, alpha, gamma)


def _slab(flat, rows_p, width):
    n = flat.shape[0]
    pad = rows_p * width - n
    if pad:  # only materialize a padded copy when actually needed
        flat = jnp.pad(flat, (0, pad))
    return flat.reshape(rows_p, width)


def focal_loss(inputs, targets, alpha=1.0, gamma=2.0, reduction="mean"):
    """Pallas focal loss. inputs/targets: same shape (e.g. (N,1,H,W) or (N,))."""
    orig_shape = inputs.shape
    x = inputs.reshape(-1)          # keep original dtype; cast happens in-kernel
    t = targets.reshape(-1)
    n = x.shape[0]

    width = _LANES
    rows = max(1, pl.cdiv(n, width))
    rows_p = pl.cdiv(rows, _SUBLANE) * _SUBLANE
    tile_rows = min(_MAX_TILE_ROWS, rows_p)
    grid = pl.cdiv(rows_p, tile_rows)

    xp = _slab(x, rows_p, width)
    tp = _slab(t, rows_p, width)

    if reduction in ("mean", "sum"):
        needs_mask = (grid * tile_rows * width) != n
        kernel = functools.partial(
            _focal_reduce_kernel,
            alpha=float(alpha), gamma=float(gamma), n=n, needs_mask=needs_mask,
        )
        partials = pl.pallas_call(
            kernel,
            out_shape=jax.ShapeDtypeStruct((grid, _SUBLANE, width), jnp.float32),
            grid_spec=pltpu.PrefetchScalarGridSpec(
                num_scalar_prefetch=0,
                grid=(grid,),
                in_specs=[
                    pl.BlockSpec((tile_rows, width), lambda i: (i, 0)),
                    pl.BlockSpec((tile_rows, width), lambda i: (i, 0)),
                ],
                out_specs=pl.BlockSpec((1, _SUBLANE, width), lambda i: (i, 0, 0)),
            ),
            compiler_params=pltpu.CompilerParams(
                dimension_semantics=("parallel",)  # independent blocks -> megacore on v7x
            ),
        )(xp, tp)
        total = jnp.sum(partials)
        if reduction == "mean":
            return total / jnp.float32(n)
        return total
    else:  # 'none'
        kernel = functools.partial(
            _focal_elemwise_kernel, alpha=float(alpha), gamma=float(gamma)
        )
        out = pl.pallas_call(
            kernel,
            out_shape=jax.ShapeDtypeStruct((rows_p, width), jnp.float32),
            grid_spec=pltpu.PrefetchScalarGridSpec(
                num_scalar_prefetch=0,
                grid=(grid,),
                in_specs=[
                    pl.BlockSpec((tile_rows, width), lambda i: (i, 0)),
                    pl.BlockSpec((tile_rows, width), lambda i: (i, 0)),
                ],
                out_specs=pl.BlockSpec((tile_rows, width), lambda i: (i, 0)),
            ),
            compiler_params=pltpu.CompilerParams(
                dimension_semantics=("parallel",)
            ),
        )(xp, tp)
        return out.reshape(-1)[:n].reshape(orig_shape)


def _focal_loss_ref(inputs, targets, alpha=1.0, gamma=2.0, reduction="mean"):
    x = inputs.astype(jnp.float32)
    t = targets.astype(jnp.float32)
    bce = jnp.maximum(x, 0.0) - x * t + jnp.log1p(jnp.exp(-jnp.abs(x)))
    pt = jnp.exp(-bce)
    fl = alpha * (1.0 - pt) ** gamma * bce
    if reduction == "mean":
        return fl.mean()
    if reduction == "sum":
        return fl.sum()
    return fl


def _check(logits, targets):
    out_mean = focal_loss(logits, targets, reduction="mean")
    out_sum = focal_loss(logits, targets, reduction="sum")
    out_none = focal_loss(logits, targets, reduction="none")
    jax.block_until_ready((out_mean, out_sum, out_none))

    ref_mean = _focal_loss_ref(logits, targets, reduction="mean")
    ref_sum = _focal_loss_ref(logits, targets, reduction="sum")
    ref_none = _focal_loss_ref(logits, targets, reduction="none")

    assert jnp.allclose(out_mean, ref_mean, rtol=1e-5, atol=1e-6), (out_mean, ref_mean)
    assert jnp.allclose(out_sum, ref_sum, rtol=1e-5, atol=1e-4), (out_sum, ref_sum)
    assert jnp.allclose(out_none, ref_none, rtol=1e-5, atol=1e-5)


if __name__ == "__main__":
    key = jax.random.PRNGKey(0)

    # Primary small case: (N, 1, H, W) logits as in the module docstring.
    k1, k2, key = jax.random.split(key, 3)
    logits = jax.random.normal(k1, (2, 1, 16, 16), dtype=jnp.float32) * 2.0
    targets = (jax.random.uniform(k2, (2, 1, 16, 16)) > 0.5).astype(jnp.float32)
    _check(logits, targets)

    # Multi-block case: exercises grid > 1, ragged last block, and tail masking.
    k1, k2, key = jax.random.split(key, 3)
    logits2 = jax.random.normal(k1, (2, 1, 513, 515), dtype=jnp.float32) * 2.0
    targets2 = (jax.random.uniform(k2, (2, 1, 513, 515)) > 0.5).astype(jnp.float32)
    _check(logits2, targets2)

    # 1-D (N,) label case from the docstring.
    k1, k2, key = jax.random.split(key, 3)
    logits3 = jax.random.normal(k1, (7,), dtype=jnp.float32)
    targets3 = (jax.random.uniform(k2, (7,)) > 0.5).astype(jnp.float32)
    _check(logits3, targets3)

    print("KERNEL_OK")
</pallas_src>

<mosaic_0001>
module attributes {stable_mosaic.version = 11 : i64} {
  func.func @_focal_reduce_kernel(%arg0: i32, %arg1: memref<8x512xf32, #tpu.memory_space<vmem>>, %arg2: memref<8x512xf32, #tpu.memory_space<vmem>>, %arg3: memref<1x8x512xf32, #tpu.memory_space<vmem>>) attributes {dimension_semantics = [#tpu.dimension_semantics<parallel>], iteration_bounds = array<i64: 1>, scalar_prefetch = 0 : i64, scratch_operands = 0 : i64, tpu.core_type = #tpu.core_type<tc>, window_params = [{transform_indices = @transform_0, window_bounds = array<i64: 8, 512>}, {transform_indices = @transform_1, window_bounds = array<i64: 8, 512>}, {transform_indices = @transform_2, window_bounds = array<i64: 1, 8, 512>}]} {
    %c0 = arith.constant 0 : index
    %c0_0 = arith.constant 0 : index
    %0 = vector.load %arg1[%c0, %c0_0] : memref<8x512xf32, #tpu.memory_space<vmem>>, vector<8x512xf32>
    %c0_1 = arith.constant 0 : index
    %c0_2 = arith.constant 0 : index
    %1 = vector.load %arg2[%c0_1, %c0_2] : memref<8x512xf32, #tpu.memory_space<vmem>>, vector<8x512xf32>
    %cst = arith.constant 0.000000e+00 : f32
    %2 = vector.broadcast %cst : f32 to vector<8x512xf32>
    %3 = arith.maximumf %0, %2 : vector<8x512xf32>
    %4 = arith.mulf %0, %1 : vector<8x512xf32>
    %5 = arith.subf %3, %4 : vector<8x512xf32>
    %6 = math.absf %0 : vector<8x512xf32>
    %cst_3 = arith.constant 0.000000e+00 : f32
    %7 = vector.broadcast %cst_3 : f32 to vector<8x512xf32>
    %8 = arith.subf %7, %6 : vector<8x512xf32>
    %9 = math.exp %8 : vector<8x512xf32>
    %10 = math.log1p %9 : vector<8x512xf32>
    %11 = arith.addf %5, %10 : vector<8x512xf32>
    %cst_4 = arith.constant 0.000000e+00 : f32
    %12 = vector.broadcast %cst_4 : f32 to vector<8x512xf32>
    %13 = arith.subf %12, %11 : vector<8x512xf32>
    %14 = math.exp %13 : vector<8x512xf32>
    %cst_5 = arith.constant 1.000000e+00 : f32
    %15 = vector.broadcast %cst_5 : f32 to vector<8x512xf32>
    %16 = arith.subf %15, %14 : vector<8x512xf32>
    %17 = arith.mulf %16, %16 : vector<8x512xf32>
    %cst_6 = arith.constant 1.000000e+00 : f32
    %18 = vector.broadcast %cst_6 : f32 to vector<8x512xf32>
    %19 = arith.mulf %18, %17 : vector<8x512xf32>
    %20 = arith.mulf %19, %11 : vector<8x512xf32>
    %c0_i32 = arith.constant 0 : i32
    %21 = arith.cmpi ne, %arg0, %c0_i32 : i32
    %22 = arith.extui %21 : i1 to i32
    %c0_i32_7 = arith.constant 0 : i32
    %23 = arith.cmpi ne, %22, %c0_i32_7 : i32
    scf.if %23 {
      %27 = vector.shape_cast %20 : vector<8x512xf32> to vector<1x8x512xf32>
      %cst_10 = arith.constant dense<0.000000e+00> : vector<8x512xf32>
      %28 = vector.multi_reduction <add>, %27, %cst_10 [0] : vector<1x8x512xf32> to vector<8x512xf32>
      %29 = vector.shape_cast %28 : vector<8x512xf32> to vector<1x8x512xf32>
      %c0_11 = arith.constant 0 : index
      %c0_12 = arith.constant 0 : index
      %c0_13 = arith.constant 0 : index
      %30 = vector.load %arg3[%c0_11, %c0_12, %c0_13] : memref<1x8x512xf32, #tpu.memory_space<vmem>>, vector<1x8x512xf32>
      tpu.vector_store %arg3[%c0_11, %c0_12, %c0_13], %29 {strides = array<i32>} : memref<1x8x512xf32, #tpu.memory_space<vmem>>, vector<1x8x512xf32>,
    } else {
    }
    %c0_i32_8 = arith.constant 0 : i32
    %24 = arith.cmpi eq, %arg0, %c0_i32_8 : i32
    %25 = arith.extui %24 : i1 to i32
    %c0_i32_9 = arith.constant 0 : i32
    %26 = arith.cmpi ne, %25, %c0_i32_9 : i32
    scf.if %26 {
      %27 = tpu.iota {dimensions = array<i32: 0>} : vector<8x512xi32>
      %28 = tpu.iota {dimensions = array<i32: 1>} : vector<8x512xi32>
      %c8_i32 = arith.constant 8 : i32
      %29 = arith.muli %arg0, %c8_i32 : i32
      %30 = vector.broadcast %29 : i32 to vector<8x512xi32>
      %31 = arith.addi %30, %27 : vector<8x512xi32>
      %c512_i32 = arith.constant 512 : i32
      %32 = vector.broadcast %c512_i32 : i32 to vector<8x512xi32>
      %33 = arith.muli %31, %32 : vector<8x512xi32>
      %34 = arith.addi %33, %28 : vector<8x512xi32>
      %c512_i32_10 = arith.constant 512 : i32
      %35 = vector.broadcast %c512_i32_10 : i32 to vector<8x512xi32>
      %36 = arith.cmpi slt, %34, %35 : vector<8x512xi32>
      %cst_11 = arith.constant 0.000000e+00 : f32
      %37 = vector.broadcast %cst_11 : f32 to vector<8x512xf32>
      %38 = arith.select %36, %20, %37 : vector<8x512xi1>, vector<8x512xf32>
      %39 = vector.shape_cast %38 : vector<8x512xf32> to vector<1x8x512xf32>
      %cst_12 = arith.constant dense<0.000000e+00> : vector<8x512xf32>
      %40 = vector.multi_reduction <add>, %39, %cst_12 [0] : vector<1x8x512xf32> to vector<8x512xf32>
      %41 = vector.shape_cast %40 : vector<8x512xf32> to vector<1x8x512xf32>
      %c0_13 = arith.constant 0 : index
      %c0_14 = arith.constant 0 : index
      %c0_15 = arith.constant 0 : index
      %42 = vector.load %arg3[%c0_13, %c0_14, %c0_15] : memref<1x8x512xf32, #tpu.memory_space<vmem>>, vector<1x8x512xf32>
      tpu.vector_store %arg3[%c0_13, %c0_14, %c0_15], %41 {strides = array<i32>} : memref<1x8x512xf32, #tpu.memory_space<vmem>>, vector<1x8x512xf32>,
    } else {
    }
    return
  }
  func.func @transform_0(%arg0: i32) -> (i32, i32) {
    %c0_i32 = arith.constant 0 : i32
    %c0_i32_0 = arith.constant 0 : i32
    return %arg0, %c0_i32 : i32, i32
  }
  func.func @transform_1(%arg0: i32) -> (i32, i32) {
    %c0_i32 = arith.constant 0 : i32
    %c0_i32_0 = arith.constant 0 : i32
    return %arg0, %c0_i32 : i32, i32
  }
  func.func @transform_2(%arg0: i32) -> (i32, i32, i32) {
    %c0_i32 = arith.constant 0 : i32
    %c0_i32_0 = arith.constant 0 : i32
    %c0_i32_1 = arith.constant 0 : i32
    return %arg0, %c0_i32, %c0_i32_0 : i32, i32, i32
  }
}

</mosaic_0001>

<llo_original>
// kernel: tpu_custom_call.1
$region0: #{tpu_custom_call.1}
  #allocation0 [shape = 'u32[]', space=smem, size = 0x4, offset = 0x4, fixed_abs, tag = 'smem constant byte address 0x4 - core index']
  #allocation1 [shape = 'u32[144,128]{1,0:T(1,128)}', space=vmem, size = 0x12000, scoped, tag = 'internal scratch']
  %s0 = inlined_call_operand.hbm [shape: f32[8,512], index: 0, kind: input, shape index: {}]
  %s1 = inlined_call_operand.hbm [shape: f32[8,512], index: 1, kind: input, shape index: {}]
  %s2 = inlined_call_operand.hbm [shape: f32[1,8,512], index: 2, kind: output, shape index: {}]
  %s3 = sld [smem:[#allocation0]]
  $region34: #{tpu_custom_call.1} parent=0
    _
  %s5 = ssub.s32 1, %s3
  %s6 = scalar_select 0, %s5, %s3
  $region1: #{tpu_custom_call.1} parent=0
    #allocation2 [shape = 'u8[16384]{0}', space=vmem, size = 0x4000, scoped, tag = 'input window, operand 0, single buffered']
    #allocation3 [shape = 's32[1]{0}', space=sflag, size = 0x4, scoped, tag = 'scoped memory for tpu_custom_call.1']
    #allocation4 [shape = 's32[1]{0}', space=sflag, size = 0x4, scoped, tag = 'scoped memory for tpu_custom_call.1']
    #allocation5 [shape = 'u8[16384]{0}', space=vmem, size = 0x4000, scoped, tag = 'input window, operand 1, single buffered']
    #allocation6 [shape = 's32[1]{0}', space=sflag, size = 0x4, scoped, tag = 'scoped memory for tpu_custom_call.1']
    #allocation7 [shape = 'u8[16384]{0}', space=vmem, size = 0x4000, scoped, tag = 'output window, operand 0, single buffered']
    %7 = vsyncpa [#allocation3], 0
    %8 = vsyncpa [#allocation6], 0
    %9 = vsyncpa [#allocation4], 0
    // Predicated region
    $region2: #{tpu_custom_call.1} parent=1 // pred_check
      _
    $region3: #{tpu_custom_call.1} parent=1 // pred_check_branch
      %11 = sbr.rel (0) target = $region5
    $region4: #{tpu_custom_call.1} parent=1 // pred_region
      %s13 = ssub.s32 512, 512
      %14 = vsyncadd [#allocation3], %s13
      %s16 = sshll.u32 [#allocation2], 4
      %s17 = int_to_ptr.vmem [resolvable:$true] %s16
      %19 = dma.hbm_to_vmem [thread:$0]  %s0, 512, %s17, [#allocation3]
    $region5: #{tpu_custom_call.1} parent=1 // pred_fallthru
      _
    // Predicated region
    $region6: #{tpu_custom_call.1} parent=1 // pred_check
      _
    $region7: #{tpu_custom_call.1} parent=1 // pred_check_branch
      %21 = sbr.rel (0) target = $region9
    $region8: #{tpu_custom_call.1} parent=1 // pred_region
      %s23 = ssub.s32 512, 512
      %24 = vsyncadd [#allocation6], %s23
      %s26 = sshll.u32 [#allocation5], 4
      %s27 = int_to_ptr.vmem [resolvable:$true] %s26
      %29 = dma.hbm_to_vmem [thread:$0]  %s1, 512, %s27, [#allocation6]
    $region9: #{tpu_custom_call.1} parent=1 // pred_fallthru
      _
    // Predicated region
    $region10: #{tpu_custom_call.1} parent=1 // pred_check
      _
    $region11: #{tpu_custom_call.1} parent=1 // pred_check_branch
      %31 = sbr.rel (0) target = $region13
    $region12: #{tpu_custom_call.1} parent=1 // pred_region
      %32 = dma.done [#allocation3], 512
    $region13: #{tpu_custom_call.1} parent=1 // pred_fallthru
      _
    // Predicated region
    $region14: #{tpu_custom_call.1} parent=1 // pred_check
      _
    $region15: #{tpu_custom_call.1} parent=1 // pred_check_branch
      %34 = sbr.rel (0) target = $region17
    $region16: #{tpu_custom_call.1} parent=1 // pred_region
      %35 = dma.done [#allocation6], 512
    $region17: #{tpu_custom_call.1} parent=1 // pred_fallthru
      _
    %v36 = vld [vmem:[#allocation2] sm:$0xff]
    %v37 = vld [vmem:[#allocation2 + $0x8] sm:$0xff]
    %v38 = vld [vmem:[#allocation2 + $0x10] sm:$0xff]
    %v39 = vld [vmem:[#allocation2 + $0x18] sm:$0xff]
    %v40 = vld [vmem:[#allocation5] sm:$0xff]
    %v41 = vld [vmem:[#allocation5 + $0x8] sm:$0xff]
    %v42 = vld [vmem:[#allocation5 + $0x10] sm:$0xff]
    %v43 = vld [vmem:[#allocation5 + $0x18] sm:$0xff]
    %v44 = vmax.f32 %v36, 0.0
    %v45 = vmax.f32 %v37, 0.0
    %v46 = vmax.f32 %v38, 0.0
    %v47 = vmax.f32 %v39, 0.0
    %v48 = vmul.f32 %v36, %v40
    %v49 = vmul.f32 %v37, %v41
    %v50 = vmul.f32 %v38, %v42
    %v51 = vmul.f32 %v39, %v43
    %v52 = vsub.f32 %v44, %v48
    %v53 = vsub.f32 %v45, %v49
    %v54 = vsub.f32 %v46, %v50
    %v55 = vsub.f32 %v47, %v51
    %v56 = vand.u32 2147483647, %v36
    %v57 = vand.u32 2147483647, %v37
    %v58 = vand.u32 2147483647, %v38
    %v59 = vand.u32 2147483647, %v39
    %v60 = vsub.f32 0.0, %v56
    %v61 = vsub.f32 0.0, %v57
    %v62 = vsub.f32 0.0, %v58
    %v63 = vsub.f32 0.0, %v59
    %v64 = vmul.f32 %v60, 1.442695
    %v65 = vpow.pop %v64
    %v66 = vmul.f32 %v61, 1.442695
    %v67 = vpow.pop %v66
    %v68 = vmul.f32 %v62, 1.442695
    %v69 = vpow.pop %v68
    %v70 = vmul.f32 %v63, 1.442695
    %v71 = vpow.pop %v70
    %v72 = vadd.f32 %v65, 1.0
    %v73 = vlog2.pop %v72
    %v74 = vmul.f32 %v73, 0.6931472
    %v75 = vmul.f32 -0.5, %v65
    %v76 = vadd.f32 %v75, 1.0
    %v77 = vmul.f32 %v76, %v65
    %v78 = vand.u32 2147483647, %v65
    %vm79 = vcmp.lt.f32.partialorder %v78, 0.0004427343
    %v80 = vsel %vm79, %v77, %v74
    %v81 = vadd.f32 %v67, 1.0
    %v82 = vlog2.pop %v81
    %v83 = vmul.f32 %v82, 0.6931472
    %v84 = vmul.f32 -0.5, %v67
    %v85 = vadd.f32 %v84, 1.0
    %v86 = vmul.f32 %v85, %v67
    %v87 = vand.u32 2147483647, %v67
    %vm88 = vcmp.lt.f32.partialorder %v87, 0.0004427343
    %v89 = vsel %vm88, %v86, %v83
    %v90 = vadd.f32 %v69, 1.0
    %v91 = vlog2.pop %v90
    %v92 = vmul.f32 %v91, 0.6931472
    %v93 = vmul.f32 -0.5, %v69
    %v94 = vadd.f32 %v93, 1.0
    %v95 = vmul.f32 %v94, %v69
    %v96 = vand.u32 2147483647, %v69
    %vm97 = vcmp.lt.f32.partialorder %v96, 0.0004427343
    %v98 = vsel %vm97, %v95, %v92
    %v99 = vadd.f32 %v71, 1.0
    %v100 = vlog2.pop %v99
    %v101 = vmul.f32 %v100, 0.6931472
    %v102 = vmul.f32 -0.5, %v71
    %v103 = vadd.f32 %v102, 1.0
    %v104 = vmul.f32 %v103, %v71
    %v105 = vand.u32 2147483647, %v71
    %vm106 = vcmp.lt.f32.partialorder %v105, 0.0004427343
    %v107 = vsel %vm106, %v104, %v101
    %v108 = vadd.f32 %v52, %v80
    %v109 = vadd.f32 %v53, %v89
    %v110 = vadd.f32 %v54, %v98
    %v111 = vadd.f32 %v55, %v107
    %v112 = vsub.f32 0.0, %v108
    %v113 = vsub.f32 0.0, %v109
    %v114 = vsub.f32 0.0, %v110
    %v115 = vsub.f32 0.0, %v111
    %v116 = vmul.f32 %v112, 1.442695
    %v117 = vpow.pop %v116
    %v118 = vmul.f32 %v113, 1.442695
    %v119 = vpow.pop %v118
    %v120 = vmul.f32 %v114, 1.442695
    %v121 = vpow.pop %v120
    %v122 = vmul.f32 %v115, 1.442695
    %v123 = vpow.pop %v122
    %v124 = vsub.f32 1.0, %v117
    %v125 = vsub.f32 1.0, %v119
    %v126 = vsub.f32 1.0, %v121
    %v127 = vsub.f32 1.0, %v123
    %v128 = vmul.f32 %v124, %v124
    %v129 = vmul.f32 %v125, %v125
    %v130 = vmul.f32 %v126, %v126
    %v131 = vmul.f32 %v127, %v127
    %v132 = vmul.f32 %v128, %v108
    %v133 = vmul.f32 %v129, %v109
    %v134 = vmul.f32 %v130, %v110
    %v135 = vmul.f32 %v131, %v111
    %p136 = scmp.ne.s32.totalorder 0, 0
    // Predicated region
    $region18: #{tpu_custom_call.1} parent=1 // pred_check
      %p137 = pneg %p136
    $region19: #{tpu_custom_call.1} parent=1 // pred_check_branch
      %139 = sbr.rel (%p137) target = $region21
    $region20: #{tpu_custom_call.1} parent=1 // pred_region
      %v140 = vadd.f32 %v132, 0.0
      %v141 = vadd.f32 %v133, 0.0
      %v142 = vadd.f32 %v134, 0.0
      %v143 = vadd.f32 %v135, 0.0
      %144 = vst [vmem:[#allocation7] sm:$0xff] %v140
      %145 = vst [vmem:[#allocation7 + $0x8] sm:$0xff] %v141
      %146 = vst [vmem:[#allocation7 + $0x10] sm:$0xff] %v142
      %147 = vst [vmem:[#allocation7 + $0x18] sm:$0xff] %v143
    $region21: #{tpu_custom_call.1} parent=1 // pred_fallthru
      _
    %p148 = scmp.eq.s32.totalorder 0, 0
    // Predicated region
    $region22: #{tpu_custom_call.1} parent=1 // pred_check
      %p149 = pneg %p148
    $region23: #{tpu_custom_call.1} parent=1 // pred_check_branch
      %151 = sbr.rel (%p149) target = $region25
    $region24: #{tpu_custom_call.1} parent=1 // pred_region
      %v152 = vlaneseq
      %v153 = vshrl.u32 %v152, 7
      %v154 = vlaneseq
      %v155 = vand.u32 %v154, 127
      %v156 = vadd.s32 %v155, 128
      %v157 = vadd.s32 %v155, 256
      %v158 = vadd.s32 %v155, 384
      %s159 = smul.u32 0, 8
      %v160 = vstv %s159
      %v161 = vadd.s32 %v160, %v153
      %v162 = vmul.u32 %v161, 512
      %v163 = vadd.s32 %v162, %v155
      %v164 = vadd.s32 %v162, %v156
      %v165 = vadd.s32 %v162, %v157
      %v166 = vadd.s32 %v162, %v158
      %vm167 = vcmp.lt.s32.totalorder %v163, 512
      %vm168 = vcmp.lt.s32.totalorder %v164, 512
      %vm169 = vcmp.lt.s32.totalorder %v165, 512
      %vm170 = vcmp.lt.s32.totalorder %v166, 512
      %v171 = vsel %vm167, %v132, 0.0
      %v172 = vsel %vm168, %v133, 0.0
      %v173 = vsel %vm169, %v134, 0.0
      %v174 = vsel %vm170, %v135, 0.0
      %v175 = vadd.f32 %v171, 0.0
      %v176 = vadd.f32 %v172, 0.0
      %v177 = vadd.f32 %v173, 0.0
      %v178 = vadd.f32 %v174, 0.0
      %179 = vst [vmem:[#allocation7] sm:$0xff] %v175
      %180 = vst [vmem:[#allocation7 + $0x8] sm:$0xff] %v176
      %181 = vst [vmem:[#allocation7 + $0x10] sm:$0xff] %v177
      %182 = vst [vmem:[#allocation7 + $0x18] sm:$0xff] %v178
    $region25: #{tpu_custom_call.1} parent=1 // pred_fallthru
      _
    // Predicated region
    $region26: #{tpu_custom_call.1} parent=1 // pred_check
      _
    $region27: #{tpu_custom_call.1} parent=1 // pred_check_branch
      %184 = sbr.rel (0) target = $region29
    $region28: #{tpu_custom_call.1} parent=1 // pred_region
      %s186 = ssub.s32 512, 512
      %187 = vsyncadd [#allocation4], %s186
      %s189 = sshll.u32 [#allocation7], 4
      %s190 = int_to_ptr.vmem [resolvable:$true] %s189
      %192 = dma.vmem_to_hbm [thread:$0]  %s190, 512, %s2, [#allocation4]
    $region29: #{tpu_custom_call.1} parent=1 // pred_fallthru
      _
    // Predicated region
    $region30: #{tpu_custom_call.1} parent=1 // pred_check
      _
    $region31: #{tpu_custom_call.1} parent=1 // pred_check_branch
      %194 = sbr.rel (0) target = $region33
    $region32: #{tpu_custom_call.1} parent=1 // pred_region
      %195 = dma.done [#allocation4], 512
    $region33: #{tpu_custom_call.1} parent=1 // pred_fallthru
      _
    %196 = vsyncpa [#allocation3], 1
    %197 = vsyncpa [#allocation6], 1
    %198 = vsyncpa [#allocation4], 1

</llo_original>
